<compile_context>
chip_gen: v5e
topology: v5e:2x2
jax: 0.10.0
libtpu: 0.0.40
codegen_flags: <defaults>
</compile_context>

<pallas_src>
import math

import jax
import jax.numpy as jnp
from jax.experimental import pallas as pl
from jax.experimental.pallas import tpu as pltpu  # noqa: F401  (tuning knobs at larger sizes)

D_MODEL = 32
NHEAD = 4
HEAD_DIM = D_MODEL // NHEAD
DIM_FF = 64
LN_EPS = 1e-5
NEG_INF = -1e30

LANES = 128                        # weight-slab lane width
VEC_BASE = 4 * D_MODEL + DIM_FF    # row where the packed bias/LN vectors start (192)
SLAB_ROWS = VEC_BASE + 16          # 208 rows (multiple of 8 sublanes)


# --------------------------------------------------------------------------
# shared math helper (usable both inside the kernel and in the JAX reference)
# --------------------------------------------------------------------------
def _layer_norm(x, w, b):
    mean = jnp.mean(x, axis=-1, keepdims=True)
    var = jnp.mean((x - mean) ** 2, axis=-1, keepdims=True)
    return (x - mean) * jax.lax.rsqrt(var + LN_EPS) * w + b


# --------------------------------------------------------------------------
# Pallas kernel: full encoder layer, whole batch, single invocation
# --------------------------------------------------------------------------
def encoder_layer_kernel(src_ref, pos_ref, bias_ref, w_ref, out_ref):
    D, H, Hd, FF = D_MODEL, NHEAD, HEAD_DIM, DIM_FF

    src = src_ref[...]               # [N, D]  value / residual input  (N = HW*B)
    x = src + pos_ref[...]           # [N, D]  query/key input (src + pos)
    bias = bias_ref[...]             # [N, N]  additive mask: batch-block + key padding

    # ---- packed parameters: one VMEM slab, static (8-aligned) slices --------
    wqk = w_ref[0:D, 0:2 * D]                 # [D, 2D]  fused Q|K weights (Q pre-scaled)
    wv = w_ref[D:2 * D, 0:D]                  # [D, D]
    wo = w_ref[2 * D:3 * D, 0:D]              # [D, D]
    f1w = w_ref[3 * D:4 * D, 0:FF]            # [D, FF]
    f2w = w_ref[4 * D:4 * D + FF, 0:D]        # [FF, D]
    vecs = w_ref[VEC_BASE:VEC_BASE + 16, :]   # [16, 128] all bias / LN vectors
    bqk = vecs[0:1, 0:2 * D]
    bv = vecs[1:2, 0:D]
    bo = vecs[2:3, 0:D]
    f1b = vecs[3:4, 0:FF]
    f2b = vecs[4:5, 0:D]
    n1w = vecs[5:6, 0:D]
    n1b = vecs[6:7, 0:D]
    n2w = vecs[7:8, 0:D]
    n2b = vecs[8:9, 0:D]

    # ---- fused Q/K and V projections: two lane-dense MXU passes, all tokens --
    qk = jnp.dot(x, wqk, preferred_element_type=jnp.float32) + bqk      # [N, 2D]
    v = jnp.dot(src, wv, preferred_element_type=jnp.float32) + bv       # [N, D]

    # ---- attention: per-head only; batch handled by block-diagonal bias -----
    ctx_heads = []
    for h in range(H):               # H == 4, static -> fully unrolled
        qh = qk[:, h * Hd:(h + 1) * Hd]            # [N, Hd]  (already * 1/sqrt(Hd))
        kh = qk[:, D + h * Hd:D + (h + 1) * Hd]    # [N, Hd]
        vh = v[:, h * Hd:(h + 1) * Hd]             # [N, Hd]
        s = jax.lax.dot_general(qh, kh, (((1,), (1,)), ((), ())),
                                preferred_element_type=jnp.float32)     # [N, N]
        s = s + bias
        s = s - jnp.max(s, axis=-1, keepdims=True)
        e = jnp.exp(s)
        p = e * pl.reciprocal(jnp.sum(e, axis=-1, keepdims=True), approx=True)
        ctx_heads.append(jnp.dot(p, vh, preferred_element_type=jnp.float32))
    ctx = jnp.concatenate(ctx_heads, axis=-1)       # [N, D]  heads back in lanes

    # ---- output projection: one K=D matmul -----------------------------------
    attn = jnp.dot(ctx, wo, preferred_element_type=jnp.float32) + bo

    # ---- residual + norm1 (dropout == identity in eval mode) -----------------
    t = _layer_norm(src + attn, n1w, n1b)

    # ---- feed-forward over all tokens at once ---------------------------------
    hidden = jnp.maximum(
        jnp.dot(t, f1w, preferred_element_type=jnp.float32) + f1b, 0.0)
    ff = jnp.dot(hidden, f2w, preferred_element_type=jnp.float32) + f2b

    out_ref[...] = _layer_norm(t + ff, n2w, n2b)    # [N, D], single dense store


# --------------------------------------------------------------------------
# wrapper-side packing helpers (one-time parameter re-layout)
# --------------------------------------------------------------------------
def _full_spec(shape):
    n = len(shape)
    return pl.BlockSpec(shape, lambda: (0,) * n)


def pack_params(params):
    """Pack all weights/biases into a single [SLAB_ROWS, 128] f32 slab.
    The 1/sqrt(head_dim) attention scale is folded into W_q / b_q here."""
    D, FF = D_MODEL, DIM_FF
    scale = 1.0 / math.sqrt(HEAD_DIM)
    in_w, in_b = params["in_w"], params["in_b"]          # [D, 3D], [3D]
    wqk = jnp.concatenate([in_w[:, :D] * scale, in_w[:, D:2 * D]], axis=1)  # [D, 2D]
    bqk = jnp.concatenate([in_b[:D] * scale, in_b[D:2 * D]])                # [2D]

    slab = jnp.zeros((SLAB_ROWS, LANES), jnp.float32)
    slab = slab.at[0:D, 0:2 * D].set(wqk)
    slab = slab.at[D:2 * D, 0:D].set(in_w[:, 2 * D:])
    slab = slab.at[2 * D:3 * D, 0:D].set(params["out_w"])
    slab = slab.at[3 * D:4 * D, 0:FF].set(params["f1w"])
    slab = slab.at[4 * D:4 * D + FF, 0:D].set(params["f2w"])
    vb = VEC_BASE
    slab = slab.at[vb + 0, 0:2 * D].set(bqk)
    slab = slab.at[vb + 1, 0:D].set(in_b[2 * D:])
    slab = slab.at[vb + 2, 0:D].set(params["out_b"])
    slab = slab.at[vb + 3, 0:FF].set(params["f1b"])
    slab = slab.at[vb + 4, 0:D].set(params["f2b"])
    slab = slab.at[vb + 5, 0:D].set(params["n1w"])
    slab = slab.at[vb + 6, 0:D].set(params["n1b"])
    slab = slab.at[vb + 7, 0:D].set(params["n2w"])
    slab = slab.at[vb + 8, 0:D].set(params["n2b"])
    return slab


def build_attention_bias(padding_mask, HW, B):
    """[HW*B, HW*B] additive bias: 0 where (same batch & key not padded), else -1e30.
    Rows of the flattened activations follow the free [HW, B, D] -> [HW*B, D]
    reshape, i.e. row = hw*B + b."""
    n = HW * B
    row = jnp.arange(n, dtype=jnp.int32)
    b_idx = row % B
    hw_idx = row // B
    same_batch = b_idx[:, None] == b_idx[None, :]
    key_padded = padding_mask[b_idx, hw_idx]                 # [n]
    valid = same_batch & jnp.logical_not(key_padded)[None, :]
    return jnp.where(valid, jnp.float32(0.0), jnp.float32(NEG_INF))


def transformer_encoder_layer_forward(src, pos, padding_mask, params):
    """src, pos: [HW, B, D]; padding_mask: [B, HW] bool (True == padded key)."""
    HW, B, D = src.shape
    assert D == D_MODEL
    N = HW * B

    # Free, metadata-only reshapes (no HBM transpose copies).
    src2 = src.reshape(N, D).astype(jnp.float32)
    pos2 = pos.reshape(N, D).astype(jnp.float32)
    bias = build_attention_bias(padding_mask, HW, B)
    slab = pack_params(params)   # in production, precompute once at model-load time

    args = (src2, pos2, bias, slab)   # 4 operands total (was 19)
    out = pl.pallas_call(
        encoder_layer_kernel,
        out_shape=jax.ShapeDtypeStruct((N, D), jnp.float32),
        in_specs=[_full_spec(a.shape) for a in args],
        out_specs=_full_spec((N, D)),
    )(*args)

    return out.reshape(HW, B, D)     # free reshape back to [HW, B, D]


# --------------------------------------------------------------------------
# plain-JAX reference (mirrors the PyTorch module math) for correctness check
# --------------------------------------------------------------------------
def reference_forward(src, pos, padding_mask, p):
    HW, B, D = src.shape
    H, Hd = NHEAD, HEAD_DIM
    x = src + pos
    q = jnp.einsum('sbd,de->sbe', x, p["in_w"][:, :D]) + p["in_b"][:D]
    k = jnp.einsum('sbd,de->sbe', x, p["in_w"][:, D:2 * D]) + p["in_b"][D:2 * D]
    v = jnp.einsum('sbd,de->sbe', src, p["in_w"][:, 2 * D:]) + p["in_b"][2 * D:]
    qh = q.reshape(HW, B, H, Hd)
    kh = k.reshape(HW, B, H, Hd)
    vh = v.reshape(HW, B, H, Hd)
    s = jnp.einsum('qbhd,kbhd->bhqk', qh, kh) / math.sqrt(Hd)
    s = jnp.where(padding_mask[:, None, None, :], jnp.float32(NEG_INF), s)
    a = jax.nn.softmax(s, axis=-1)
    ctx = jnp.einsum('bhqk,kbhd->qbhd', a, vh).reshape(HW, B, D)
    attn = jnp.einsum('sbd,de->sbe', ctx, p["out_w"]) + p["out_b"]
    h1 = _layer_norm(src + attn, p["n1w"], p["n1b"])
    ff = jnp.maximum(jnp.einsum('sbd,df->sbf', h1, p["f1w"]) + p["f1b"], 0.0)
    ff = jnp.einsum('sbf,fd->sbd', ff, p["f2w"]) + p["f2b"]
    return _layer_norm(h1 + ff, p["n2w"], p["n2b"])


# --------------------------------------------------------------------------
# deterministic synthetic parameters (x @ W layout, matching nn.MultiheadAttention)
# --------------------------------------------------------------------------
def init_params(key):
    ks = jax.random.split(key, 12)
    g = lambda k, s, sc=0.1: jax.random.normal(k, s, jnp.float32) * sc
    D, FF = D_MODEL, DIM_FF
    return {
        "in_w": g(ks[0], (D, 3 * D)), "in_b": g(ks[1], (3 * D,)),
        "out_w": g(ks[2], (D, D)),    "out_b": g(ks[3], (D,)),
        "f1w": g(ks[4], (D, FF)),     "f1b": g(ks[5], (FF,)),
        "f2w": g(ks[6], (FF, D)),     "f2b": g(ks[7], (D,)),
        "n1w": 1.0 + g(ks[8], (D,), 0.02),  "n1b": g(ks[9], (D,), 0.02),
        "n2w": 1.0 + g(ks[10], (D,), 0.02), "n2b": g(ks[11], (D,), 0.02),
    }


if __name__ == "__main__":
    key = jax.random.PRNGKey(0)
    ks = jax.random.split(key, 3)

    HW, B, D = 16, 2, D_MODEL
    src = jax.random.normal(ks[0], (HW, B, D), jnp.float32)
    pos = jax.random.normal(ks[1], (HW, B, D), jnp.float32)
    # padding mask: True == padded key; pad the last 3 positions of batch 1
    padding_mask = jnp.zeros((B, HW), jnp.bool_).at[1, HW - 3:].set(True)

    params = init_params(ks[2])

    out = transformer_encoder_layer_forward(src, pos, padding_mask, params)
    out = jax.block_until_ready(out)
    assert out.shape == (HW, B, D), out.shape

    ref = jax.block_until_ready(reference_forward(src, pos, padding_mask, params))

    if not jnp.allclose(out, ref, rtol=1e-2, atol=1e-2):
        raise AssertionError("Pallas kernel output mismatch vs JAX reference")

    print("KERNEL_OK")
</pallas_src>

<mosaic_0001>
module attributes {stable_mosaic.version = 11 : i64} {
  func.func @encoder_layer_kernel(%arg0: memref<32x32xf32, #tpu.memory_space<vmem>>, %arg1: memref<32x32xf32, #tpu.memory_space<vmem>>, %arg2: memref<32x32xf32, #tpu.memory_space<vmem>>, %arg3: memref<208x128xf32, #tpu.memory_space<vmem>>, %arg4: memref<32x32xf32, #tpu.memory_space<vmem>>) attributes {dimension_semantics = [], scalar_prefetch = 0 : i64, scratch_operands = 0 : i64, tpu.core_type = #tpu.core_type<tc>} {
    %c0 = arith.constant 0 : index
    %c0_0 = arith.constant 0 : index
    %0 = vector.load %arg0[%c0, %c0_0] : memref<32x32xf32, #tpu.memory_space<vmem>>, vector<32x32xf32>
    %c0_1 = arith.constant 0 : index
    %c0_2 = arith.constant 0 : index
    %1 = vector.load %arg1[%c0_1, %c0_2] : memref<32x32xf32, #tpu.memory_space<vmem>>, vector<32x32xf32>
    %2 = arith.addf %0, %1 : vector<32x32xf32>
    %c0_3 = arith.constant 0 : index
    %c0_4 = arith.constant 0 : index
    %3 = vector.load %arg2[%c0_3, %c0_4] : memref<32x32xf32, #tpu.memory_space<vmem>>, vector<32x32xf32>
    %c0_5 = arith.constant 0 : index
    %c0_6 = arith.constant 0 : index
    %4 = vector.load %arg3[%c0_5, %c0_6] : memref<208x128xf32, #tpu.memory_space<vmem>>, vector<32x64xf32>
    %c32 = arith.constant 32 : index
    %c0_7 = arith.constant 0 : index
    %5 = vector.load %arg3[%c32, %c0_7] : memref<208x128xf32, #tpu.memory_space<vmem>>, vector<32x32xf32>
    %c64 = arith.constant 64 : index
    %c0_8 = arith.constant 0 : index
    %6 = vector.load %arg3[%c64, %c0_8] : memref<208x128xf32, #tpu.memory_space<vmem>>, vector<32x32xf32>
    %c96 = arith.constant 96 : index
    %c0_9 = arith.constant 0 : index
    %7 = vector.load %arg3[%c96, %c0_9] : memref<208x128xf32, #tpu.memory_space<vmem>>, vector<32x64xf32>
    %c128 = arith.constant 128 : index
    %c0_10 = arith.constant 0 : index
    %8 = vector.load %arg3[%c128, %c0_10] : memref<208x128xf32, #tpu.memory_space<vmem>>, vector<64x32xf32>
    %c192 = arith.constant 192 : index
    %c0_11 = arith.constant 0 : index
    %9 = vector.load %arg3[%c192, %c0_11] : memref<208x128xf32, #tpu.memory_space<vmem>>, vector<16x128xf32>
    %10 = vector.extract_strided_slice %9 {offsets = [0, 0], sizes = [1, 64], strides = [1, 1]} : vector<16x128xf32> to vector<1x64xf32>
    %11 = vector.extract_strided_slice %9 {offsets = [1, 0], sizes = [1, 32], strides = [1, 1]} : vector<16x128xf32> to vector<1x32xf32>
    %12 = vector.extract_strided_slice %9 {offsets = [2, 0], sizes = [1, 32], strides = [1, 1]} : vector<16x128xf32> to vector<1x32xf32>
    %13 = vector.extract_strided_slice %9 {offsets = [3, 0], sizes = [1, 64], strides = [1, 1]} : vector<16x128xf32> to vector<1x64xf32>
    %14 = vector.extract_strided_slice %9 {offsets = [4, 0], sizes = [1, 32], strides = [1, 1]} : vector<16x128xf32> to vector<1x32xf32>
    %15 = vector.extract_strided_slice %9 {offsets = [5, 0], sizes = [1, 32], strides = [1, 1]} : vector<16x128xf32> to vector<1x32xf32>
    %16 = vector.extract_strided_slice %9 {offsets = [6, 0], sizes = [1, 32], strides = [1, 1]} : vector<16x128xf32> to vector<1x32xf32>
    %17 = vector.extract_strided_slice %9 {offsets = [7, 0], sizes = [1, 32], strides = [1, 1]} : vector<16x128xf32> to vector<1x32xf32>
    %18 = vector.extract_strided_slice %9 {offsets = [8, 0], sizes = [1, 32], strides = [1, 1]} : vector<16x128xf32> to vector<1x32xf32>
    %cst = arith.constant dense<0.000000e+00> : vector<32x64xf32>
    %19 = tpu.matmul %2, %4, %cst {dimension_numbers = #tpu.dot_dimension_numbers<[1], [0], [0], [1], [0, 0, 1, 1], [], []>} : vector<32x32xf32>, vector<32x64xf32>, vector<32x64xf32> -> vector<32x64xf32>
    %20 = vector.broadcast %10 : vector<1x64xf32> to vector<32x64xf32>
    %21 = arith.addf %19, %20 : vector<32x64xf32>
    %cst_12 = arith.constant dense<0.000000e+00> : vector<32x32xf32>
    %22 = tpu.matmul %0, %5, %cst_12 {dimension_numbers = #tpu.dot_dimension_numbers<[1], [0], [0], [1], [0, 0, 1, 1], [], []>} : vector<32x32xf32>, vector<32x32xf32>, vector<32x32xf32> -> vector<32x32xf32>
    %23 = vector.broadcast %11 : vector<1x32xf32> to vector<32x32xf32>
    %24 = arith.addf %22, %23 : vector<32x32xf32>
    %25 = vector.extract_strided_slice %21 {offsets = [0, 0], sizes = [32, 8], strides = [1, 1]} : vector<32x64xf32> to vector<32x8xf32>
    %26 = vector.extract_strided_slice %21 {offsets = [0, 32], sizes = [32, 8], strides = [1, 1]} : vector<32x64xf32> to vector<32x8xf32>
    %27 = vector.extract_strided_slice %24 {offsets = [0, 0], sizes = [32, 8], strides = [1, 1]} : vector<32x32xf32> to vector<32x8xf32>
    %cst_13 = arith.constant dense<0.000000e+00> : vector<32x32xf32>
    %28 = tpu.matmul %25, %26, %cst_13 {dimension_numbers = #tpu.dot_dimension_numbers<[1], [1], [0], [0], [0, 0, 1, 0], [], []>} : vector<32x8xf32>, vector<32x8xf32>, vector<32x32xf32> -> vector<32x32xf32>
    %29 = arith.addf %28, %3 : vector<32x32xf32>
    %cst_14 = arith.constant dense<0xFF800000> : vector<32xf32>
    %30 = vector.multi_reduction <maximumf>, %29, %cst_14 [1] : vector<32x32xf32> to vector<32xf32>
    %31 = vector.shape_cast %30 : vector<32xf32> to vector<32x1xf32>
    %32 = vector.broadcast %31 : vector<32x1xf32> to vector<32x32xf32>
    %33 = arith.subf %29, %32 : vector<32x32xf32>
    %34 = math.exp %33 : vector<32x32xf32>
    %cst_15 = arith.constant dense<0.000000e+00> : vector<32xf32>
    %35 = vector.multi_reduction <add>, %34, %cst_15 [1] : vector<32x32xf32> to vector<32xf32>
    %36 = vector.shape_cast %35 : vector<32xf32> to vector<32x1xf32>
    %37 = tpu.reciprocal %36 {approx = true} : vector<32x1xf32> -> vector<32x1xf32>
    %38 = vector.broadcast %37 : vector<32x1xf32> to vector<32x32xf32>
    %39 = arith.mulf %34, %38 : vector<32x32xf32>
    %cst_16 = arith.constant dense<0.000000e+00> : vector<32x8xf32>
    %40 = tpu.matmul %39, %27, %cst_16 {dimension_numbers = #tpu.dot_dimension_numbers<[1], [0], [0], [1], [0, 0, 1, 1], [], []>} : vector<32x32xf32>, vector<32x8xf32>, vector<32x8xf32> -> vector<32x8xf32>
    %41 = vector.extract_strided_slice %21 {offsets = [0, 8], sizes = [32, 8], strides = [1, 1]} : vector<32x64xf32> to vector<32x8xf32>
    %42 = vector.extract_strided_slice %21 {offsets = [0, 40], sizes = [32, 8], strides = [1, 1]} : vector<32x64xf32> to vector<32x8xf32>
    %43 = vector.extract_strided_slice %24 {offsets = [0, 8], sizes = [32, 8], strides = [1, 1]} : vector<32x32xf32> to vector<32x8xf32>
    %cst_17 = arith.constant dense<0.000000e+00> : vector<32x32xf32>
    %44 = tpu.matmul %41, %42, %cst_17 {dimension_numbers = #tpu.dot_dimension_numbers<[1], [1], [0], [0], [0, 0, 1, 0], [], []>} : vector<32x8xf32>, vector<32x8xf32>, vector<32x32xf32> -> vector<32x32xf32>
    %45 = arith.addf %44, %3 : vector<32x32xf32>
    %cst_18 = arith.constant dense<0xFF800000> : vector<32xf32>
    %46 = vector.multi_reduction <maximumf>, %45, %cst_18 [1] : vector<32x32xf32> to vector<32xf32>
    %47 = vector.shape_cast %46 : vector<32xf32> to vector<32x1xf32>
    %48 = vector.broadcast %47 : vector<32x1xf32> to vector<32x32xf32>
    %49 = arith.subf %45, %48 : vector<32x32xf32>
    %50 = math.exp %49 : vector<32x32xf32>
    %cst_19 = arith.constant dense<0.000000e+00> : vector<32xf32>
    %51 = vector.multi_reduction <add>, %50, %cst_19 [1] : vector<32x32xf32> to vector<32xf32>
    %52 = vector.shape_cast %51 : vector<32xf32> to vector<32x1xf32>
    %53 = tpu.reciprocal %52 {approx = true} : vector<32x1xf32> -> vector<32x1xf32>
    %54 = vector.broadcast %53 : vector<32x1xf32> to vector<32x32xf32>
    %55 = arith.mulf %50, %54 : vector<32x32xf32>
    %cst_20 = arith.constant dense<0.000000e+00> : vector<32x8xf32>
    %56 = tpu.matmul %55, %43, %cst_20 {dimension_numbers = #tpu.dot_dimension_numbers<[1], [0], [0], [1], [0, 0, 1, 1], [], []>} : vector<32x32xf32>, vector<32x8xf32>, vector<32x8xf32> -> vector<32x8xf32>
    %57 = vector.extract_strided_slice %21 {offsets = [0, 16], sizes = [32, 8], strides = [1, 1]} : vector<32x64xf32> to vector<32x8xf32>
    %58 = vector.extract_strided_slice %21 {offsets = [0, 48], sizes = [32, 8], strides = [1, 1]} : vector<32x64xf32> to vector<32x8xf32>
    %59 = vector.extract_strided_slice %24 {offsets = [0, 16], sizes = [32, 8], strides = [1, 1]} : vector<32x32xf32> to vector<32x8xf32>
    %cst_21 = arith.constant dense<0.000000e+00> : vector<32x32xf32>
    %60 = tpu.matmul %57, %58, %cst_21 {dimension_numbers = #tpu.dot_dimension_numbers<[1], [1], [0], [0], [0, 0, 1, 0], [], []>} : vector<32x8xf32>, vector<32x8xf32>, vector<32x32xf32> -> vector<32x32xf32>
    %61 = arith.addf %60, %3 : vector<32x32xf32>
    %cst_22 = arith.constant dense<0xFF800000> : vector<32xf32>
    %62 = vector.multi_reduction <maximumf>, %61, %cst_22 [1] : vector<32x32xf32> to vector<32xf32>
    %63 = vector.shape_cast %62 : vector<32xf32> to vector<32x1xf32>
    %64 = vector.broadcast %63 : vector<32x1xf32> to vector<32x32xf32>
    %65 = arith.subf %61, %64 : vector<32x32xf32>
    %66 = math.exp %65 : vector<32x32xf32>
    %cst_23 = arith.constant dense<0.000000e+00> : vector<32xf32>
    %67 = vector.multi_reduction <add>, %66, %cst_23 [1] : vector<32x32xf32> to vector<32xf32>
    %68 = vector.shape_cast %67 : vector<32xf32> to vector<32x1xf32>
    %69 = tpu.reciprocal %68 {approx = true} : vector<32x1xf32> -> vector<32x1xf32>
    %70 = vector.broadcast %69 : vector<32x1xf32> to vector<32x32xf32>
    %71 = arith.mulf %66, %70 : vector<32x32xf32>
    %cst_24 = arith.constant dense<0.000000e+00> : vector<32x8xf32>
    %72 = tpu.matmul %71, %59, %cst_24 {dimension_numbers = #tpu.dot_dimension_numbers<[1], [0], [0], [1], [0, 0, 1, 1], [], []>} : vector<32x32xf32>, vector<32x8xf32>, vector<32x8xf32> -> vector<32x8xf32>
    %73 = vector.extract_strided_slice %21 {offsets = [0, 24], sizes = [32, 8], strides = [1, 1]} : vector<32x64xf32> to vector<32x8xf32>
    %74 = vector.extract_strided_slice %21 {offsets = [0, 56], sizes = [32, 8], strides = [1, 1]} : vector<32x64xf32> to vector<32x8xf32>
    %75 = vector.extract_strided_slice %24 {offsets = [0, 24], sizes = [32, 8], strides = [1, 1]} : vector<32x32xf32> to vector<32x8xf32>
    %cst_25 = arith.constant dense<0.000000e+00> : vector<32x32xf32>
    %76 = tpu.matmul %73, %74, %cst_25 {dimension_numbers = #tpu.dot_dimension_numbers<[1], [1], [0], [0], [0, 0, 1, 0], [], []>} : vector<32x8xf32>, vector<32x8xf32>, vector<32x32xf32> -> vector<32x32xf32>
    %77 = arith.addf %76, %3 : vector<32x32xf32>
    %cst_26 = arith.constant dense<0xFF800000> : vector<32xf32>
    %78 = vector.multi_reduction <maximumf>, %77, %cst_26 [1] : vector<32x32xf32> to vector<32xf32>
    %79 = vector.shape_cast %78 : vector<32xf32> to vector<32x1xf32>
    %80 = vector.broadcast %79 : vector<32x1xf32> to vector<32x32xf32>
    %81 = arith.subf %77, %80 : vector<32x32xf32>
    %82 = math.exp %81 : vector<32x32xf32>
    %cst_27 = arith.constant dense<0.000000e+00> : vector<32xf32>
    %83 = vector.multi_reduction <add>, %82, %cst_27 [1] : vector<32x32xf32> to vector<32xf32>
    %84 = vector.shape_cast %83 : vector<32xf32> to vector<32x1xf32>
    %85 = tpu.reciprocal %84 {approx = true} : vector<32x1xf32> -> vector<32x1xf32>
    %86 = vector.broadcast %85 : vector<32x1xf32> to vector<32x32xf32>
    %87 = arith.mulf %82, %86 : vector<32x32xf32>
    %cst_28 = arith.constant dense<0.000000e+00> : vector<32x8xf32>
    %88 = tpu.matmul %87, %75, %cst_28 {dimension_numbers = #tpu.dot_dimension_numbers<[1], [0], [0], [1], [0, 0, 1, 1], [], []>} : vector<32x32xf32>, vector<32x8xf32>, vector<32x8xf32> -> vector<32x8xf32>
    %89 = tpu.concatenate %40, %56, %72, %88 in 1 : vector<32x8xf32>, vector<32x8xf32>, vector<32x8xf32>, vector<32x8xf32> -> vector<32x32xf32>
    %cst_29 = arith.constant dense<0.000000e+00> : vector<32x32xf32>
    %90 = tpu.matmul %89, %6, %cst_29 {dimension_numbers = #tpu.dot_dimension_numbers<[1], [0], [0], [1], [0, 0, 1, 1], [], []>} : vector<32x32xf32>, vector<32x32xf32>, vector<32x32xf32> -> vector<32x32xf32>
    %91 = vector.broadcast %12 : vector<1x32xf32> to vector<32x32xf32>
    %92 = arith.addf %90, %91 : vector<32x32xf32>
    %93 = arith.addf %0, %92 : vector<32x32xf32>
    %cst_30 = arith.constant dense<0.000000e+00> : vector<32xf32>
    %94 = vector.multi_reduction <add>, %93, %cst_30 [1] : vector<32x32xf32> to vector<32xf32>
    %95 = vector.shape_cast %94 : vector<32xf32> to vector<32x1xf32>
    %cst_31 = arith.constant 3.200000e+01 : f32
    %96 = vector.broadcast %cst_31 : f32 to vector<32x1xf32>
    %97 = arith.divf %95, %96 : vector<32x1xf32>
    %98 = vector.broadcast %97 : vector<32x1xf32> to vector<32x32xf32>
    %99 = arith.subf %93, %98 : vector<32x32xf32>
    %100 = arith.mulf %99, %99 : vector<32x32xf32>
    %cst_32 = arith.constant dense<0.000000e+00> : vector<32xf32>
    %101 = vector.multi_reduction <add>, %100, %cst_32 [1] : vector<32x32xf32> to vector<32xf32>
    %102 = vector.shape_cast %101 : vector<32xf32> to vector<32x1xf32>
    %cst_33 = arith.constant 3.200000e+01 : f32
    %103 = vector.broadcast %cst_33 : f32 to vector<32x1xf32>
    %104 = arith.divf %102, %103 : vector<32x1xf32>
    %105 = vector.broadcast %97 : vector<32x1xf32> to vector<32x32xf32>
    %106 = arith.subf %93, %105 : vector<32x32xf32>
    %cst_34 = arith.constant 9.99999974E-6 : f32
    %107 = vector.broadcast %cst_34 : f32 to vector<32x1xf32>
    %108 = arith.addf %104, %107 : vector<32x1xf32>
    %109 = math.rsqrt %108 : vector<32x1xf32>
    %110 = vector.broadcast %109 : vector<32x1xf32> to vector<32x32xf32>
    %111 = arith.mulf %106, %110 : vector<32x32xf32>
    %112 = vector.broadcast %15 : vector<1x32xf32> to vector<32x32xf32>
    %113 = arith.mulf %111, %112 : vector<32x32xf32>
    %114 = vector.broadcast %16 : vector<1x32xf32> to vector<32x32xf32>
    %115 = arith.addf %113, %114 : vector<32x32xf32>
    %cst_35 = arith.constant dense<0.000000e+00> : vector<32x64xf32>
    %116 = tpu.matmul %115, %7, %cst_35 {dimension_numbers = #tpu.dot_dimension_numbers<[1], [0], [0], [1], [0, 0, 1, 1], [], []>} : vector<32x32xf32>, vector<32x64xf32>, vector<32x64xf32> -> vector<32x64xf32>
    %117 = vector.broadcast %13 : vector<1x64xf32> to vector<32x64xf32>
    %118 = arith.addf %116, %117 : vector<32x64xf32>
    %cst_36 = arith.constant 0.000000e+00 : f32
    %119 = vector.broadcast %cst_36 : f32 to vector<32x64xf32>
    %120 = arith.maximumf %118, %119 : vector<32x64xf32>
    %cst_37 = arith.constant dense<0.000000e+00> : vector<32x32xf32>
    %121 = tpu.matmul %120, %8, %cst_37 {dimension_numbers = #tpu.dot_dimension_numbers<[1], [0], [0], [1], [0, 0, 1, 1], [], []>} : vector<32x64xf32>, vector<64x32xf32>, vector<32x32xf32> -> vector<32x32xf32>
    %122 = vector.broadcast %14 : vector<1x32xf32> to vector<32x32xf32>
    %123 = arith.addf %121, %122 : vector<32x32xf32>
    %124 = arith.addf %115, %123 : vector<32x32xf32>
    %cst_38 = arith.constant dense<0.000000e+00> : vector<32xf32>
    %125 = vector.multi_reduction <add>, %124, %cst_38 [1] : vector<32x32xf32> to vector<32xf32>
    %126 = vector.shape_cast %125 : vector<32xf32> to vector<32x1xf32>
    %cst_39 = arith.constant 3.200000e+01 : f32
    %127 = vector.broadcast %cst_39 : f32 to vector<32x1xf32>
    %128 = arith.divf %126, %127 : vector<32x1xf32>
    %129 = vector.broadcast %128 : vector<32x1xf32> to vector<32x32xf32>
    %130 = arith.subf %124, %129 : vector<32x32xf32>
    %131 = arith.mulf %130, %130 : vector<32x32xf32>
    %cst_40 = arith.constant dense<0.000000e+00> : vector<32xf32>
    %132 = vector.multi_reduction <add>, %131, %cst_40 [1] : vector<32x32xf32> to vector<32xf32>
    %133 = vector.shape_cast %132 : vector<32xf32> to vector<32x1xf32>
    %cst_41 = arith.constant 3.200000e+01 : f32
    %134 = vector.broadcast %cst_41 : f32 to vector<32x1xf32>
    %135 = arith.divf %133, %134 : vector<32x1xf32>
    %136 = vector.broadcast %128 : vector<32x1xf32> to vector<32x32xf32>
    %137 = arith.subf %124, %136 : vector<32x32xf32>
    %cst_42 = arith.constant 9.99999974E-6 : f32
    %138 = vector.broadcast %cst_42 : f32 to vector<32x1xf32>
    %139 = arith.addf %135, %138 : vector<32x1xf32>
    %140 = math.rsqrt %139 : vector<32x1xf32>
    %141 = vector.broadcast %140 : vector<32x1xf32> to vector<32x32xf32>
    %142 = arith.mulf %137, %141 : vector<32x32xf32>
    %143 = vector.broadcast %17 : vector<1x32xf32> to vector<32x32xf32>
    %144 = arith.mulf %142, %143 : vector<32x32xf32>
    %145 = vector.broadcast %18 : vector<1x32xf32> to vector<32x32xf32>
    %146 = arith.addf %144, %145 : vector<32x32xf32>
    %c0_43 = arith.constant 0 : index
    %c0_44 = arith.constant 0 : index
    %147 = vector.load %arg4[%c0_43, %c0_44] : memref<32x32xf32, #tpu.memory_space<vmem>>, vector<32x32xf32>
    tpu.vector_store %arg4[%c0_43, %c0_44], %146 {strides = array<i32>} : memref<32x32xf32, #tpu.memory_space<vmem>>, vector<32x32xf32>,
    return
  }
}

</mosaic_0001>

<llo_original>
// kernel: tpu_custom_call.1
$region0: #{tpu_custom_call.1}
  #allocation0 [shape = 'u32[]', space=smem, size = 0x4, offset = 0x4, fixed_abs, tag = 'smem constant byte address 0x4 - core index']
  #allocation1 [shape = 'u32[72,128]{1,0:T(1,128)}', space=vmem, size = 0x9000, scoped, tag = 'internal scratch']
  %s0 = inlined_call_operand.hbm [shape: f32[32,32], index: 0, kind: input, shape index: {}]
  %s1 = inlined_call_operand.hbm [shape: f32[32,32], index: 1, kind: input, shape index: {}]
  %s2 = inlined_call_operand.hbm [shape: f32[32,32], index: 2, kind: input, shape index: {}]
  %s3 = inlined_call_operand.hbm [shape: f32[208,128], index: 3, kind: input, shape index: {}]
  %s4 = inlined_call_operand.hbm [shape: f32[32,32], index: 4, kind: output, shape index: {}]
  %s5 = sld [smem:[#allocation0]]
  $region42: #{tpu_custom_call.1} parent=0
    _
  %s7 = ssub.s32 1, %s5
  %s8 = scalar_select 0, %s7, %s5
  $region1: #{tpu_custom_call.1} parent=0
    #allocation2 [shape = 'u8[16384]{0}', space=vmem, size = 0x4000, scoped, tag = 'input window, operand 0, single buffered']
    #allocation3 [shape = 's32[1]{0}', space=sflag, size = 0x4, scoped, tag = 'scoped memory for tpu_custom_call.1']
    #allocation4 [shape = 's32[1]{0}', space=sflag, size = 0x4, scoped, tag = 'scoped memory for tpu_custom_call.1']
    #allocation5 [shape = 'u8[16384]{0}', space=vmem, size = 0x4000, scoped, tag = 'input window, operand 1, single buffered']
    #allocation6 [shape = 's32[1]{0}', space=sflag, size = 0x4, scoped, tag = 'scoped memory for tpu_custom_call.1']
    #allocation7 [shape = 'u8[16384]{0}', space=vmem, size = 0x4000, scoped, tag = 'input window, operand 2, single buffered']
    #allocation8 [shape = 'u8[106496]{0}', space=vmem, size = 0x1a000, scoped, tag = 'input window, operand 3, single buffered']
    #allocation9 [shape = 's32[1]{0}', space=sflag, size = 0x4, scoped, tag = 'scoped memory for tpu_custom_call.1']
    #allocation10 [shape = 'u8[16384]{0}', space=vmem, size = 0x4000, scoped, tag = 'output window, operand 0, single buffered']
    %9 = vsyncpa [#allocation3], 0
    %10 = vsyncpa [#allocation6], 0
    %11 = vsyncpa [#allocation9], 0
    %12 = vsyncpa [#allocation4], 0
    // Predicated region
    $region2: #{tpu_custom_call.1} parent=1 // pred_check
      _
    $region3: #{tpu_custom_call.1} parent=1 // pred_check_branch
      %14 = sbr.rel (0) target = $region5
    $region4: #{tpu_custom_call.1} parent=1 // pred_region
      %16 = vsyncadd [#allocation3], 0
      %s17 = sshll.u32 %s0, 4
      %s18 = int_to_ptr.hbm [resolvable:$true] %s17
      %s19 = sshll.u32 [#allocation2], 4
      %s20 = int_to_ptr.vmem [resolvable:$true] %s19
      %25 = dma.hbm_to_vmem [thread:$0]  %s18, 512, %s20, [#allocation3], 128, 128, 8
    $region5: #{tpu_custom_call.1} parent=1 // pred_fallthru
      _
    // Predicated region
    $region6: #{tpu_custom_call.1} parent=1 // pred_check
      _
    $region7: #{tpu_custom_call.1} parent=1 // pred_check_branch
      %27 = sbr.rel (0) target = $region9
    $region8: #{tpu_custom_call.1} parent=1 // pred_region
      %29 = vsyncadd [#allocation6], 0
      %s30 = sshll.u32 %s1, 4
      %s31 = int_to_ptr.hbm [resolvable:$true] %s30
      %s32 = sshll.u32 [#allocation5], 4
      %s33 = int_to_ptr.vmem [resolvable:$true] %s32
      %38 = dma.hbm_to_vmem [thread:$0]  %s31, 512, %s33, [#allocation6], 128, 128, 8
    $region9: #{tpu_custom_call.1} parent=1 // pred_fallthru
      _
    // Predicated region
    $region10: #{tpu_custom_call.1} parent=1 // pred_check
      _
    $region11: #{tpu_custom_call.1} parent=1 // pred_check_branch
      %40 = sbr.rel (0) target = $region13
    $region12: #{tpu_custom_call.1} parent=1 // pred_region
      %42 = vsyncadd [#allocation6], 0
      %s43 = sshll.u32 %s2, 4
      %s44 = int_to_ptr.hbm [resolvable:$true] %s43
      %s45 = sshll.u32 [#allocation7], 4
      %s46 = int_to_ptr.vmem [resolvable:$true] %s45
      %51 = dma.hbm_to_vmem [thread:$0]  %s44, 512, %s46, [#allocation6], 128, 128, 8
    $region13: #{tpu_custom_call.1} parent=1 // pred_fallthru
      _
    // Predicated region
    $region14: #{tpu_custom_call.1} parent=1 // pred_check
      _
    $region15: #{tpu_custom_call.1} parent=1 // pred_check_branch
      %53 = sbr.rel (0) target = $region17
    $region16: #{tpu_custom_call.1} parent=1 // pred_region
      %55 = vsyncadd [#allocation9], 0
      %s56 = sshll.u32 %s3, 4
      %s57 = int_to_ptr.hbm [resolvable:$true] %s56
      %s58 = sshll.u32 [#allocation8], 4
      %s59 = int_to_ptr.vmem [resolvable:$true] %s58
      %64 = dma.hbm_to_vmem [thread:$0]  %s57, 3328, %s59, [#allocation9], 128, 128, 8
    $region17: #{tpu_custom_call.1} parent=1 // pred_fallthru
      _
    // Predicated region
    $region18: #{tpu_custom_call.1} parent=1 // pred_check
      _
    $region19: #{tpu_custom_call.1} parent=1 // pred_check_branch
      %66 = sbr.rel (0) target = $region21
    $region20: #{tpu_custom_call.1} parent=1 // pred_region
      %68 = dma.done [#allocation3], 512
    $region21: #{tpu_custom_call.1} parent=1 // pred_fallthru
      _
    // Predicated region
    $region22: #{tpu_custom_call.1} parent=1 // pred_check
      _
    $region23: #{tpu_custom_call.1} parent=1 // pred_check_branch
      %70 = sbr.rel (0) target = $region25
    $region24: #{tpu_custom_call.1} parent=1 // pred_region
      %72 = dma.done [#allocation6], 512
    $region25: #{tpu_custom_call.1} parent=1 // pred_fallthru
      _
    // Predicated region
    $region26: #{tpu_custom_call.1} parent=1 // pred_check
      _
    $region27: #{tpu_custom_call.1} parent=1 // pred_check_branch
      %74 = sbr.rel (0) target = $region29
    $region28: #{tpu_custom_call.1} parent=1 // pred_region
      %76 = dma.done [#allocation6], 512
    $region29: #{tpu_custom_call.1} parent=1 // pred_fallthru
      _
    // Predicated region
    $region30: #{tpu_custom_call.1} parent=1 // pred_check
      _
    $region31: #{tpu_custom_call.1} parent=1 // pred_check_branch
      %78 = sbr.rel (0) target = $region33
    $region32: #{tpu_custom_call.1} parent=1 // pred_region
      %80 = dma.done [#allocation9], 3328
    $region33: #{tpu_custom_call.1} parent=1 // pred_fallthru
      _
    %v81 = vld [vmem:[#allocation2] sm:$0xff]
    %v82 = vld [vmem:[#allocation2 + $0x8] sm:$0xff]
    %v83 = vld [vmem:[#allocation2 + $0x10] sm:$0xff]
    %v84 = vld [vmem:[#allocation2 + $0x18] sm:$0xff]
    %v85 = vld [vmem:[#allocation5] sm:$0xff]
    %v86 = vld [vmem:[#allocation5 + $0x8] sm:$0xff]
    %v87 = vld [vmem:[#allocation5 + $0x10] sm:$0xff]
    %v88 = vld [vmem:[#allocation5 + $0x18] sm:$0xff]
    %v89 = vadd.f32 %v81, %v85
    %v90 = vadd.f32 %v82, %v86
    %v91 = vadd.f32 %v83, %v87
    %v92 = vadd.f32 %v84, %v88
    %v93 = vld [vmem:[#allocation7] sm:$0xff]
    %v94 = vld [vmem:[#allocation7 + $0x8] sm:$0xff]
    %v95 = vld [vmem:[#allocation7 + $0x10] sm:$0xff]
    %v96 = vld [vmem:[#allocation7 + $0x18] sm:$0xff]
    %v97 = vld [vmem:[#allocation8] sm:$0xff]
    %v98 = vld [vmem:[#allocation8 + $0x8] sm:$0xff]
    %v99 = vld [vmem:[#allocation8 + $0x10] sm:$0xff]
    %v100 = vld [vmem:[#allocation8 + $0x18] sm:$0xff]
    %v101 = vld [vmem:[#allocation8 + $0x20] sm:$0xff]
    %v102 = vld [vmem:[#allocation8 + $0x28] sm:$0xff]
    %v103 = vld [vmem:[#allocation8 + $0x30] sm:$0xff]
    %v104 = vld [vmem:[#allocation8 + $0x38] sm:$0xff]
    %v105 = vld [vmem:[#allocation8 + $0x40] sm:$0xff]
    %v106 = vld [vmem:[#allocation8 + $0x48] sm:$0xff]
    %v107 = vld [vmem:[#allocation8 + $0x50] sm:$0xff]
    %v108 = vld [vmem:[#allocation8 + $0x58] sm:$0xff]
    %v109 = vld [vmem:[#allocation8 + $0x60] sm:$0xff]
    %v110 = vld [vmem:[#allocation8 + $0x68] sm:$0xff]
    %v111 = vld [vmem:[#allocation8 + $0x70] sm:$0xff]
    %v112 = vld [vmem:[#allocation8 + $0x78] sm:$0xff]
    %v113 = vld [vmem:[#allocation8 + $0x80] sm:$0xff]
    %v114 = vld [vmem:[#allocation8 + $0x88] sm:$0xff]
    %v115 = vld [vmem:[#allocation8 + $0x90] sm:$0xff]
    %v116 = vld [vmem:[#allocation8 + $0x98] sm:$0xff]
    %v117 = vld [vmem:[#allocation8 + $0xa0] sm:$0xff]
    %v118 = vld [vmem:[#allocation8 + $0xa8] sm:$0xff]
    %v119 = vld [vmem:[#allocation8 + $0xb0] sm:$0xff]
    %v120 = vld [vmem:[#allocation8 + $0xb8] sm:$0xff]
    %v121 = vld [vmem:[#allocation8 + $0xc0] sm:$0xff]
    %v122 = vld [vmem:[#allocation8 + $0xc8] sm:$0xff]
    %v123 = vperm.slane %v121, 0
    %vm124 = vcmask 261120
    %v126 = vsel %vm124, %v89, 0
    %v129 = vsel %vm124, %v90, 0
    %v132 = vsel %vm124, %v91, 0
    %v135 = vsel %vm124, %v92, 0
    %137 = vmatpush.msra.mxu0 0.0
    %138 = vmatpush.msra.mxu0 0.0
    %139 = vmatpush.msra.mxu0 0.0
    %140 = vmatpush.msra.mxu0 0.0
    %141 = vmatpush.msra.mxu0 0.0
    %142 = vmatpush.msra.mxu0 0.0
    %143 = vmatpush.msra.mxu0 0.0
    %144 = vmatpush.msra.mxu0 0.0
    %145 = vmatpush.msra.mxu0 0.0
    %146 = vmatpush.msra.mxu0 0.0
    %147 = vmatpush.msra.mxu0 0.0
    %148 = vmatpush.msra.mxu0 0.0
    %149 = vmatpush.msra.mxu0 %v100
    %150 = vmatpush.msra.mxu0 %v99
    %151 = vmatpush.msra.mxu0 %v98
    %152 = vmatpush.msra.mxu0 %v97
    %153 = vmatmul.f32.gmra.mxu0 %v126
    %v154 = vpop.f32.mrf.mxu0
    %v155 = vadd.f32 %v123, %v154
    %156 = vmatmul.f32.gmra.mxu0 %v129
    %v157 = vpop.f32.mrf.mxu0
    %v158 = vadd.f32 %v123, %v157
    %159 = vmatmul.f32.gmra.mxu0 %v132
    %v160 = vpop.f32.mrf.mxu0
    %v161 = vadd.f32 %v123, %v160
    %162 = vmatmul.f32.gmra.mxu0 %v135
    %v163 = vpop.f32.mrf.mxu0
    %v164 = vadd.f32 %v123, %v163
    %165 = vdwg.mxu0
    %v166 = vperm.slane %v121, 1
    %v168 = vsel %vm124, %v81, 0
    %v171 = vsel %vm124, %v82, 0
    %v174 = vsel %vm124, %v83, 0
    %v177 = vsel %vm124, %v84, 0
    %179 = vmatpush.msra.mxu0 0.0
    %180 = vmatpush.msra.mxu0 0.0
    %181 = vmatpush.msra.mxu0 0.0
    %182 = vmatpush.msra.mxu0 0.0
    %183 = vmatpush.msra.mxu0 0.0
    %184 = vmatpush.msra.mxu0 0.0
    %185 = vmatpush.msra.mxu0 0.0
    %186 = vmatpush.msra.mxu0 0.0
    %187 = vmatpush.msra.mxu0 0.0
    %188 = vmatpush.msra.mxu0 0.0
    %189 = vmatpush.msra.mxu0 0.0
    %190 = vmatpush.msra.mxu0 0.0
    %191 = vmatpush.msra.mxu0 %v104
    %192 = vmatpush.msra.mxu0 %v103
    %193 = vmatpush.msra.mxu0 %v102
    %194 = vmatpush.msra.mxu0 %v101
    %195 = vmatmul.f32.gmra.mxu0 %v168
    %v196 = vpop.f32.mrf.mxu0
    %v197 = vadd.f32 %v166, %v196
    %198 = vmatmul.f32.gmra.mxu0 %v171
    %v199 = vpop.f32.mrf.mxu0
    %v200 = vadd.f32 %v166, %v199
    %201 = vmatmul.f32.gmra.mxu0 %v174
    %v202 = vpop.f32.mrf.mxu0
    %v203 = vadd.f32 %v166, %v202
    %204 = vmatmul.f32.gmra.mxu0 %v177
    %v205 = vpop.f32.mrf.mxu0
    %v206 = vadd.f32 %v166, %v205
    %207 = vdwg.mxu0
    %212 = vrot.lane.b32.xlu0 %v155, 96
    %v213 = vpop.permute.xlu0 %212
    %214 = vrot.lane.b32.xlu0 %v158, 96
    %v215 = vpop.permute.xlu0 %214
    %216 = vrot.lane.b32.xlu0 %v161, 96
    %v217 = vpop.permute.xlu0 %216
    %218 = vrot.lane.b32.xlu0 %v164, 96
    %v219 = vpop.permute.xlu0 %218
    %vm220 = vcmask 64512
    %v221 = vsel %vm220, %v155, 0
    %v223 = vsel %vm220, %v158, 0
    %v225 = vsel %vm220, %v161, 0
    %v227 = vsel %vm220, %v164, 0
    %v229 = vsel %vm220, %v213, 0
    %v231 = vsel %vm220, %v215, 0
    %v233 = vsel %vm220, %v217, 0
    %v235 = vsel %vm220, %v219, 0
    %237 = vmatpush.xpose.msra.mxu0 0.0
    %238 = vmatpush.xpose.msra.mxu0 0.0
    %239 = vmatpush.xpose.msra.mxu0 0.0
    %240 = vmatpush.xpose.msra.mxu0 0.0
    %241 = vmatpush.xpose.msra.mxu0 0.0
    %242 = vmatpush.xpose.msra.mxu0 0.0
    %243 = vmatpush.xpose.msra.mxu0 0.0
    %244 = vmatpush.xpose.msra.mxu0 0.0
    %245 = vmatpush.xpose.msra.mxu0 0.0
    %246 = vmatpush.xpose.msra.mxu0 0.0
    %247 = vmatpush.xpose.msra.mxu0 0.0
    %248 = vmatpush.xpose.msra.mxu0 0.0
    %249 = vmatpush.xpose.msra.mxu0 %v235
    %250 = vmatpush.xpose.msra.mxu0 %v233
    %251 = vmatpush.xpose.msra.mxu0 %v231
    %252 = vmatpush.xpose.msra.mxu0 %v229
    %253 = vmatmul.f32.gmra.mxu0 %v221
    %v254 = vpop.f32.mrf.mxu0
    %v255 = vadd.f32 %v93, %v254
    %256 = vmatmul.f32.gmra.mxu0 %v223
    %v257 = vpop.f32.mrf.mxu0
    %v258 = vadd.f32 %v94, %v257
    %259 = vmatmul.f32.gmra.mxu0 %v225
    %v260 = vpop.f32.mrf.mxu0
    %v261 = vadd.f32 %v95, %v260
    %262 = vmatmul.f32.gmra.mxu0 %v227
    %v263 = vpop.f32.mrf.mxu0
    %v264 = vadd.f32 %v96, %v263
    %265 = vdwg.mxu0
    %v266 = vsel %vm124, %v255, -inf
    %267 = vmax.xlane.f32.xlu0 %v266
    %v268 = vpop.xlane.xlu0 %267
    %v269 = vsel %vm124, %v258, -inf
    %270 = vmax.xlane.f32.xlu0 %v269
    %v271 = vpop.xlane.xlu0 %270
    %v272 = vsel %vm124, %v261, -inf
    %273 = vmax.xlane.f32.xlu0 %v272
    %v274 = vpop.xlane.xlu0 %273
    %v275 = vsel %vm124, %v264, -inf
    %276 = vmax.xlane.f32.xlu0 %v275
    %v277 = vpop.xlane.xlu0 %276
    %v278 = vsub.f32 %v255, %v268
    %v279 = vsub.f32 %v258, %v271
    %v280 = vsub.f32 %v261, %v274
    %v281 = vsub.f32 %v264, %v277
    %v282 = vmul.f32 %v278, 1.442695
    %v283 = vpow.pop %v282
    %v284 = vmul.f32 %v279, 1.442695
    %v285 = vpow.pop %v284
    %v286 = vmul.f32 %v280, 1.442695
    %v287 = vpow.pop %v286
    %v288 = vmul.f32 %v281, 1.442695
    %v289 = vpow.pop %v288
    %v290 = vsel %vm124, %v283, 0.0
    %291 = vadd.xlane.f32.xlu0 %v290
    %v292 = vpop.xlane.xlu0 %291
    %v293 = vsel %vm124, %v285, 0.0
    %294 = vadd.xlane.f32.xlu0 %v293
    %v295 = vpop.xlane.xlu0 %294
    %v296 = vsel %vm124, %v287, 0.0
    %297 = vadd.xlane.f32.xlu0 %v296
    %v298 = vpop.xlane.xlu0 %297
    %v299 = vsel %vm124, %v289, 0.0
    %300 = vadd.xlane.f32.xlu0 %v299
    %v301 = vpop.xlane.xlu0 %300
    %v302 = vrcp.pop %v292
    %v303 = vrcp.pop %v295
    %v304 = vrcp.pop %v298
    %v305 = vrcp.pop %v301
    %v306 = vmul.f32 %v283, %v302
    %v307 = vmul.f32 %v285, %v303
    %v308 = vmul.f32 %v287, %v304
    %v309 = vmul.f32 %v289, %v305
    %v311 = vsel %vm124, %v306, 0
    %v314 = vsel %vm124, %v307, 0
    %v317 = vsel %vm124, %v308, 0
    %v320 = vsel %vm124, %v309, 0
    %322 = vmatpush.msra.mxu0 0.0
    %323 = vmatpush.msra.mxu0 0.0
    %324 = vmatpush.msra.mxu0 0.0
    %325 = vmatpush.msra.mxu0 0.0
    %326 = vmatpush.msra.mxu0 0.0
    %327 = vmatpush.msra.mxu0 0.0
    %328 = vmatpush.msra.mxu0 0.0
    %329 = vmatpush.msra.mxu0 0.0
    %330 = vmatpush.msra.mxu0 0.0
    %331 = vmatpush.msra.mxu0 0.0
    %332 = vmatpush.msra.mxu0 0.0
    %333 = vmatpush.msra.mxu0 0.0
    %334 = vmatpush.msra.mxu0 %v206
    %335 = vmatpush.msra.mxu0 %v203
    %336 = vmatpush.msra.mxu0 %v200
    %337 = vmatpush.msra.mxu0 %v197
    %338 = vmatmul.f32.gmra.mxu0 %v311
    %v339 = vpop.f32.mrf.mxu0
    %v340 = vadd.f32 0.0, %v339
    %341 = vmatmul.f32.gmra.mxu0 %v314
    %v342 = vpop.f32.mrf.mxu0
    %v343 = vadd.f32 0.0, %v342
    %344 = vmatmul.f32.gmra.mxu0 %v317
    %v345 = vpop.f32.mrf.mxu0
    %v346 = vadd.f32 0.0, %v345
    %347 = vmatmul.f32.gmra.mxu0 %v320
    %v348 = vpop.f32.mrf.mxu0
    %v349 = vadd.f32 0.0, %v348
    %350 = vdwg.mxu0
    %351 = vrot.lane.b32.xlu0 %v155, 120
    %v352 = vpop.permute.xlu0 %351
    %353 = vrot.lane.b32.xlu0 %v158, 120
    %v354 = vpop.permute.xlu0 %353
    %355 = vrot.lane.b32.xlu0 %v161, 120
    %v356 = vpop.permute.xlu0 %355
    %357 = vrot.lane.b32.xlu0 %v164, 120
    %v358 = vpop.permute.xlu0 %357
    %359 = vrot.lane.b32.xlu0 %v155, 88
    %v360 = vpop.permute.xlu0 %359
    %361 = vrot.lane.b32.xlu0 %v158, 88
    %v362 = vpop.permute.xlu0 %361
    %363 = vrot.lane.b32.xlu0 %v161, 88
    %v364 = vpop.permute.xlu0 %363
    %365 = vrot.lane.b32.xlu0 %v164, 88
    %v366 = vpop.permute.xlu0 %365
    %v367 = vsel %vm220, %v352, 0
    %v369 = vsel %vm220, %v354, 0
    %v371 = vsel %vm220, %v356, 0
    %v373 = vsel %vm220, %v358, 0
    %v375 = vsel %vm220, %v360, 0
    %v377 = vsel %vm220, %v362, 0
    %v379 = vsel %vm220, %v364, 0
    %v381 = vsel %vm220, %v366, 0
    %383 = vmatpush.xpose.msra.mxu0 0.0
    %384 = vmatpush.xpose.msra.mxu0 0.0
    %385 = vmatpush.xpose.msra.mxu0 0.0
    %386 = vmatpush.xpose.msra.mxu0 0.0
    %387 = vmatpush.xpose.msra.mxu0 0.0
    %388 = vmatpush.xpose.msra.mxu0 0.0
    %389 = vmatpush.xpose.msra.mxu0 0.0
    %390 = vmatpush.xpose.msra.mxu0 0.0
    %391 = vmatpush.xpose.msra.mxu0 0.0
    %392 = vmatpush.xpose.msra.mxu0 0.0
    %393 = vmatpush.xpose.msra.mxu0 0.0
    %394 = vmatpush.xpose.msra.mxu0 0.0
    %395 = vmatpush.xpose.msra.mxu0 %v381
    %396 = vmatpush.xpose.msra.mxu0 %v379
    %397 = vmatpush.xpose.msra.mxu0 %v377
    %398 = vmatpush.xpose.msra.mxu0 %v375
    %399 = vmatmul.f32.gmra.mxu0 %v367
    %v400 = vpop.f32.mrf.mxu0
    %v401 = vadd.f32 %v93, %v400
    %402 = vmatmul.f32.gmra.mxu0 %v369
    %v403 = vpop.f32.mrf.mxu0
    %v404 = vadd.f32 %v94, %v403
    %405 = vmatmul.f32.gmra.mxu0 %v371
    %v406 = vpop.f32.mrf.mxu0
    %v407 = vadd.f32 %v95, %v406
    %408 = vmatmul.f32.gmra.mxu0 %v373
    %v409 = vpop.f32.mrf.mxu0
    %v410 = vadd.f32 %v96, %v409
    %411 = vdwg.mxu0
    %v412 = vsel %vm124, %v401, -inf
    %413 = vmax.xlane.f32.xlu0 %v412
    %v414 = vpop.xlane.xlu0 %413
    %v415 = vsel %vm124, %v404, -inf
    %416 = vmax.xlane.f32.xlu0 %v415
    %v417 = vpop.xlane.xlu0 %416
    %v418 = vsel %vm124, %v407, -inf
    %419 = vmax.xlane.f32.xlu0 %v418
    %v420 = vpop.xlane.xlu0 %419
    %v421 = vsel %vm124, %v410, -inf
    %422 = vmax.xlane.f32.xlu0 %v421
    %v423 = vpop.xlane.xlu0 %422
    %v424 = vsub.f32 %v401, %v414
    %v425 = vsub.f32 %v404, %v417
    %v426 = vsub.f32 %v407, %v420
    %v427 = vsub.f32 %v410, %v423
    %v428 = vmul.f32 %v424, 1.442695
    %v429 = vpow.pop %v428
    %v430 = vmul.f32 %v425, 1.442695
    %v431 = vpow.pop %v430
    %v432 = vmul.f32 %v426, 1.442695
    %v433 = vpow.pop %v432
    %v434 = vmul.f32 %v427, 1.442695
    %v435 = vpow.pop %v434
    %v436 = vsel %vm124, %v429, 0.0
    %437 = vadd.xlane.f32.xlu0 %v436
    %v438 = vpop.xlane.xlu0 %437
    %v439 = vsel %vm124, %v431, 0.0
    %440 = vadd.xlane.f32.xlu0 %v439
    %v441 = vpop.xlane.xlu0 %440
    %v442 = vsel %vm124, %v433, 0.0
    %443 = vadd.xlane.f32.xlu0 %v442
    %v444 = vpop.xlane.xlu0 %443
    %v445 = vsel %vm124, %v435, 0.0
    %446 = vadd.xlane.f32.xlu0 %v445
    %v447 = vpop.xlane.xlu0 %446
    %v448 = vrcp.pop %v438
    %v449 = vrcp.pop %v441
    %v450 = vrcp.pop %v444
    %v451 = vrcp.pop %v447
    %v452 = vmul.f32 %v429, %v448
    %v453 = vmul.f32 %v431, %v449
    %v454 = vmul.f32 %v433, %v450
    %v455 = vmul.f32 %v435, %v451
    %460 = vrot.lane.b32.xlu0 %v197, 120
    %v461 = vpop.permute.xlu0 %460
    %462 = vrot.lane.b32.xlu0 %v200, 120
    %v463 = vpop.permute.xlu0 %462
    %464 = vrot.lane.b32.xlu0 %v203, 120
    %v465 = vpop.permute.xlu0 %464
    %466 = vrot.lane.b32.xlu0 %v206, 120
    %v467 = vpop.permute.xlu0 %466
    %v473 = vsel %vm124, %v452, 0
    %v476 = vsel %vm124, %v453, 0
    %v479 = vsel %vm124, %v454, 0
    %v482 = vsel %vm124, %v455, 0
    %484 = vmatpush.msra.mxu0 0.0
    %485 = vmatpush.msra.mxu0 0.0
    %486 = vmatpush.msra.mxu0 0.0
    %487 = vmatpush.msra.mxu0 0.0
    %488 = vmatpush.msra.mxu0 0.0
    %489 = vmatpush.msra.mxu0 0.0
    %490 = vmatpush.msra.mxu0 0.0
    %491 = vmatpush.msra.mxu0 0.0
    %492 = vmatpush.msra.mxu0 0.0
    %493 = vmatpush.msra.mxu0 0.0
    %494 = vmatpush.msra.mxu0 0.0
    %495 = vmatpush.msra.mxu0 0.0
    %496 = vmatpush.msra.mxu0 %v467
    %497 = vmatpush.msra.mxu0 %v465
    %498 = vmatpush.msra.mxu0 %v463
    %499 = vmatpush.msra.mxu0 %v461
    %500 = vmatmul.f32.gmra.mxu0 %v473
    %v501 = vpop.f32.mrf.mxu0
    %v502 = vadd.f32 0.0, %v501
    %503 = vmatmul.f32.gmra.mxu0 %v476
    %v504 = vpop.f32.mrf.mxu0
    %v505 = vadd.f32 0.0, %v504
    %506 = vmatmul.f32.gmra.mxu0 %v479
    %v507 = vpop.f32.mrf.mxu0
    %v508 = vadd.f32 0.0, %v507
    %509 = vmatmul.f32.gmra.mxu0 %v482
    %v510 = vpop.f32.mrf.mxu0
    %v511 = vadd.f32 0.0, %v510
    %512 = vdwg.mxu0
    %513 = vrot.lane.b32.xlu0 %v155, 112
    %v514 = vpop.permute.xlu0 %513
    %515 = vrot.lane.b32.xlu0 %v158, 112
    %v516 = vpop.permute.xlu0 %515
    %517 = vrot.lane.b32.xlu0 %v161, 112
    %v518 = vpop.permute.xlu0 %517
    %519 = vrot.lane.b32.xlu0 %v164, 112
    %v520 = vpop.permute.xlu0 %519
    %521 = vrot.lane.b32.xlu0 %v155, 80
    %v522 = vpop.permute.xlu0 %521
    %523 = vrot.lane.b32.xlu0 %v158, 80
    %v524 = vpop.permute.xlu0 %523
    %525 = vrot.lane.b32.xlu0 %v161, 80
    %v526 = vpop.permute.xlu0 %525
    %527 = vrot.lane.b32.xlu0 %v164, 80
    %v528 = vpop.permute.xlu0 %527
    %v529 = vsel %vm220, %v514, 0
    %v531 = vsel %vm220, %v516, 0
    %v533 = vsel %vm220, %v518, 0
    %v535 = vsel %vm220, %v520, 0
    %v537 = vsel %vm220, %v522, 0
    %v539 = vsel %vm220, %v524, 0
    %v541 = vsel %vm220, %v526, 0
    %v543 = vsel %vm220, %v528, 0
    %545 = vmatpush.xpose.msra.mxu0 0.0
    %546 = vmatpush.xpose.msra.mxu0 0.0
    %547 = vmatpush.xpose.msra.mxu0 0.0
    %548 = vmatpush.xpose.msra.mxu0 0.0
    %549 = vmatpush.xpose.msra.mxu0 0.0
    %550 = vmatpush.xpose.msra.mxu0 0.0
    %551 = vmatpush.xpose.msra.mxu0 0.0
    %552 = vmatpush.xpose.msra.mxu0 0.0
    %553 = vmatpush.xpose.msra.mxu0 0.0
    %554 = vmatpush.xpose.msra.mxu0 0.0
    %555 = vmatpush.xpose.msra.mxu0 0.0
    %556 = vmatpush.xpose.msra.mxu0 0.0
    %557 = vmatpush.xpose.msra.mxu0 %v543
    %558 = vmatpush.xpose.msra.mxu0 %v541
    %559 = vmatpush.xpose.msra.mxu0 %v539
    %560 = vmatpush.xpose.msra.mxu0 %v537
    %561 = vmatmul.f32.gmra.mxu0 %v529
    %v562 = vpop.f32.mrf.mxu0
    %v563 = vadd.f32 %v93, %v562
    %564 = vmatmul.f32.gmra.mxu0 %v531
    %v565 = vpop.f32.mrf.mxu0
    %v566 = vadd.f32 %v94, %v565
    %567 = vmatmul.f32.gmra.mxu0 %v533
    %v568 = vpop.f32.mrf.mxu0
    %v569 = vadd.f32 %v95, %v568
    %570 = vmatmul.f32.gmra.mxu0 %v535
    %v571 = vpop.f32.mrf.mxu0
    %v572 = vadd.f32 %v96, %v571
    %573 = vdwg.mxu0
    %v574 = vsel %vm124, %v563, -inf
    %575 = vmax.xlane.f32.xlu0 %v574
    %v576 = vpop.xlane.xlu0 %575
    %v577 = vsel %vm124, %v566, -inf
    %578 = vmax.xlane.f32.xlu0 %v577
    %v579 = vpop.xlane.xlu0 %578
    %v580 = vsel %vm124, %v569, -inf
    %581 = vmax.xlane.f32.xlu0 %v580
    %v582 = vpop.xlane.xlu0 %581
    %v583 = vsel %vm124, %v572, -inf
    %584 = vmax.xlane.f32.xlu0 %v583
    %v585 = vpop.xlane.xlu0 %584
    %v586 = vsub.f32 %v563, %v576
    %v587 = vsub.f32 %v566, %v579
    %v588 = vsub.f32 %v569, %v582
    %v589 = vsub.f32 %v572, %v585
    %v590 = vmul.f32 %v586, 1.442695
    %v591 = vpow.pop %v590
    %v592 = vmul.f32 %v587, 1.442695
    %v593 = vpow.pop %v592
    %v594 = vmul.f32 %v588, 1.442695
    %v595 = vpow.pop %v594
    %v596 = vmul.f32 %v589, 1.442695
    %v597 = vpow.pop %v596
    %v598 = vsel %vm124, %v591, 0.0
    %599 = vadd.xlane.f32.xlu0 %v598
    %v600 = vpop.xlane.xlu0 %599
    %v601 = vsel %vm124, %v593, 0.0
    %602 = vadd.xlane.f32.xlu0 %v601
    %v603 = vpop.xlane.xlu0 %602
    %v604 = vsel %vm124, %v595, 0.0
    %605 = vadd.xlane.f32.xlu0 %v604
    %v606 = vpop.xlane.xlu0 %605
    %v607 = vsel %vm124, %v597, 0.0
    %608 = vadd.xlane.f32.xlu0 %v607
    %v609 = vpop.xlane.xlu0 %608
    %v610 = vrcp.pop %v600
    %v611 = vrcp.pop %v603
    %v612 = vrcp.pop %v606
    %v613 = vrcp.pop %v609
    %v614 = vmul.f32 %v591, %v610
    %v615 = vmul.f32 %v593, %v611
    %v616 = vmul.f32 %v595, %v612
    %v617 = vmul.f32 %v597, %v613
    %618 = vrot.lane.b32.xlu0 %v197, 112
    %v619 = vpop.permute.xlu0 %618
    %620 = vrot.lane.b32.xlu0 %v200, 112
    %v621 = vpop.permute.xlu0 %620
    %622 = vrot.lane.b32.xlu0 %v203, 112
    %v623 = vpop.permute.xlu0 %622
    %624 = vrot.lane.b32.xlu0 %v206, 112
    %v625 = vpop.permute.xlu0 %624
    %v631 = vsel %vm124, %v614, 0
    %v634 = vsel %vm124, %v615, 0
    %v637 = vsel %vm124, %v616, 0
    %v640 = vsel %vm124, %v617, 0
    %642 = vmatpush.msra.mxu0 0.0
    %643 = vmatpush.msra.mxu0 0.0
    %644 = vmatpush.msra.mxu0 0.0
    %645 = vmatpush.msra.mxu0 0.0
    %646 = vmatpush.msra.mxu0 0.0
    %647 = vmatpush.msra.mxu0 0.0
    %648 = vmatpush.msra.mxu0 0.0
    %649 = vmatpush.msra.mxu0 0.0
    %650 = vmatpush.msra.mxu0 0.0
    %651 = vmatpush.msra.mxu0 0.0
    %652 = vmatpush.msra.mxu0 0.0
    %653 = vmatpush.msra.mxu0 0.0
    %654 = vmatpush.msra.mxu0 %v625
    %655 = vmatpush.msra.mxu0 %v623
    %656 = vmatpush.msra.mxu0 %v621
    %657 = vmatpush.msra.mxu0 %v619
    %658 = vmatmul.f32.gmra.mxu0 %v631
    %v659 = vpop.f32.mrf.mxu0
    %v660 = vadd.f32 0.0, %v659
    %661 = vmatmul.f32.gmra.mxu0 %v634
    %v662 = vpop.f32.mrf.mxu0
    %v663 = vadd.f32 0.0, %v662
    %664 = vmatmul.f32.gmra.mxu0 %v637
    %v665 = vpop.f32.mrf.mxu0
    %v666 = vadd.f32 0.0, %v665
    %667 = vmatmul.f32.gmra.mxu0 %v640
    %v668 = vpop.f32.mrf.mxu0
    %v669 = vadd.f32 0.0, %v668
    %670 = vdwg.mxu0
    %671 = vrot.lane.b32.xlu0 %v155, 104
    %v672 = vpop.permute.xlu0 %671
    %673 = vrot.lane.b32.xlu0 %v158, 104
    %v674 = vpop.permute.xlu0 %673
    %675 = vrot.lane.b32.xlu0 %v161, 104
    %v676 = vpop.permute.xlu0 %675
    %677 = vrot.lane.b32.xlu0 %v164, 104
    %v678 = vpop.permute.xlu0 %677
    %679 = vrot.lane.b32.xlu0 %v155, 72
    %v680 = vpop.permute.xlu0 %679
    %681 = vrot.lane.b32.xlu0 %v158, 72
    %v682 = vpop.permute.xlu0 %681
    %683 = vrot.lane.b32.xlu0 %v161, 72
    %v684 = vpop.permute.xlu0 %683
    %685 = vrot.lane.b32.xlu0 %v164, 72
    %v686 = vpop.permute.xlu0 %685
    %v687 = vsel %vm220, %v672, 0
    %v689 = vsel %vm220, %v674, 0
    %v691 = vsel %vm220, %v676, 0
    %v693 = vsel %vm220, %v678, 0
    %v695 = vsel %vm220, %v680, 0
    %v697 = vsel %vm220, %v682, 0
    %v699 = vsel %vm220, %v684, 0
    %v701 = vsel %vm220, %v686, 0
    %703 = vmatpush.xpose.msra.mxu0 0.0
    %704 = vmatpush.xpose.msra.mxu0 0.0
    %705 = vmatpush.xpose.msra.mxu0 0.0
    %706 = vmatpush.xpose.msra.mxu0 0.0
    %707 = vmatpush.xpose.msra.mxu0 0.0
    %708 = vmatpush.xpose.msra.mxu0 0.0
    %709 = vmatpush.xpose.msra.mxu0 0.0
    %710 = vmatpush.xpose.msra.mxu0 0.0
    %711 = vmatpush.xpose.msra.mxu0 0.0
    %712 = vmatpush.xpose.msra.mxu0 0.0
    %713 = vmatpush.xpose.msra.mxu0 0.0
    %714 = vmatpush.xpose.msra.mxu0 0.0
    %715 = vmatpush.xpose.msra.mxu0 %v701
    %716 = vmatpush.xpose.msra.mxu0 %v699
    %717 = vmatpush.xpose.msra.mxu0 %v697
    %718 = vmatpush.xpose.msra.mxu0 %v695
    %719 = vmatmul.f32.gmra.mxu0 %v687
    %v720 = vpop.f32.mrf.mxu0
    %v721 = vadd.f32 %v93, %v720
    %722 = vmatmul.f32.gmra.mxu0 %v689
    %v723 = vpop.f32.mrf.mxu0
    %v724 = vadd.f32 %v94, %v723
    %725 = vmatmul.f32.gmra.mxu0 %v691
    %v726 = vpop.f32.mrf.mxu0
    %v727 = vadd.f32 %v95, %v726
    %728 = vmatmul.f32.gmra.mxu0 %v693
    %v729 = vpop.f32.mrf.mxu0
    %v730 = vadd.f32 %v96, %v729
    %731 = vdwg.mxu0
    %v732 = vsel %vm124, %v721, -inf
    %733 = vmax.xlane.f32.xlu0 %v732
    %v734 = vpop.xlane.xlu0 %733
    %v735 = vsel %vm124, %v724, -inf
    %736 = vmax.xlane.f32.xlu0 %v735
    %v737 = vpop.xlane.xlu0 %736
    %v738 = vsel %vm124, %v727, -inf
    %739 = vmax.xlane.f32.xlu0 %v738
    %v740 = vpop.xlane.xlu0 %739
    %v741 = vsel %vm124, %v730, -inf
    %742 = vmax.xlane.f32.xlu0 %v741
    %v743 = vpop.xlane.xlu0 %742
    %v744 = vsub.f32 %v721, %v734
    %v745 = vsub.f32 %v724, %v737
    %v746 = vsub.f32 %v727, %v740
    %v747 = vsub.f32 %v730, %v743
    %v748 = vmul.f32 %v744, 1.442695
    %v749 = vpow.pop %v748
    %v750 = vmul.f32 %v745, 1.442695
    %v751 = vpow.pop %v750
    %v752 = vmul.f32 %v746, 1.442695
    %v753 = vpow.pop %v752
    %v754 = vmul.f32 %v747, 1.442695
    %v755 = vpow.pop %v754
    %v756 = vsel %vm124, %v749, 0.0
    %757 = vadd.xlane.f32.xlu0 %v756
    %v758 = vpop.xlane.xlu0 %757
    %v759 = vsel %vm124, %v751, 0.0
    %760 = vadd.xlane.f32.xlu0 %v759
    %v761 = vpop.xlane.xlu0 %760
    %v762 = vsel %vm124, %v753, 0.0
    %763 = vadd.xlane.f32.xlu0 %v762
    %v764 = vpop.xlane.xlu0 %763
    %v765 = vsel %vm124, %v755, 0.0
    %766 = vadd.xlane.f32.xlu0 %v765
    %v767 = vpop.xlane.xlu0 %766
    %v768 = vrcp.pop %v758
    %v769 = vrcp.pop %v761
    %v770 = vrcp.pop %v764
    %v771 = vrcp.pop %v767
    %v772 = vmul.f32 %v749, %v768
    %v773 = vmul.f32 %v751, %v769
    %v774 = vmul.f32 %v753, %v770
    %v775 = vmul.f32 %v755, %v771
    %776 = vrot.lane.b32.xlu0 %v197, 104
    %v777 = vpop.permute.xlu0 %776
    %778 = vrot.lane.b32.xlu0 %v200, 104
    %v779 = vpop.permute.xlu0 %778
    %780 = vrot.lane.b32.xlu0 %v203, 104
    %v781 = vpop.permute.xlu0 %780
    %782 = vrot.lane.b32.xlu0 %v206, 104
    %v783 = vpop.permute.xlu0 %782
    %v789 = vsel %vm124, %v772, 0
    %v792 = vsel %vm124, %v773, 0
    %v795 = vsel %vm124, %v774, 0
    %v798 = vsel %vm124, %v775, 0
    %800 = vmatpush.msra.mxu0 0.0
    %801 = vmatpush.msra.mxu0 0.0
    %802 = vmatpush.msra.mxu0 0.0
    %803 = vmatpush.msra.mxu0 0.0
    %804 = vmatpush.msra.mxu0 0.0
    %805 = vmatpush.msra.mxu0 0.0
    %806 = vmatpush.msra.mxu0 0.0
    %807 = vmatpush.msra.mxu0 0.0
    %808 = vmatpush.msra.mxu0 0.0
    %809 = vmatpush.msra.mxu0 0.0
    %810 = vmatpush.msra.mxu0 0.0
    %811 = vmatpush.msra.mxu0 0.0
    %812 = vmatpush.msra.mxu0 %v783
    %813 = vmatpush.msra.mxu0 %v781
    %814 = vmatpush.msra.mxu0 %v779
    %815 = vmatpush.msra.mxu0 %v777
    %816 = vmatmul.f32.gmra.mxu0 %v789
    %v817 = vpop.f32.mrf.mxu0
    %v818 = vadd.f32 0.0, %v817
    %819 = vmatmul.f32.gmra.mxu0 %v792
    %v820 = vpop.f32.mrf.mxu0
    %v821 = vadd.f32 0.0, %v820
    %822 = vmatmul.f32.gmra.mxu0 %v795
    %v823 = vpop.f32.mrf.mxu0
    %v824 = vadd.f32 0.0, %v823
    %825 = vmatmul.f32.gmra.mxu0 %v798
    %v826 = vpop.f32.mrf.mxu0
    %v827 = vadd.f32 0.0, %v826
    %828 = vdwg.mxu0
    %833 = vrot.lane.b32.xlu0 %v502, 8
    %v834 = vpop.permute.xlu0 %833
    %835 = vrot.lane.b32.xlu0 %v505, 8
    %v836 = vpop.permute.xlu0 %835
    %837 = vrot.lane.b32.xlu0 %v508, 8
    %v838 = vpop.permute.xlu0 %837
    %839 = vrot.lane.b32.xlu0 %v511, 8
    %v840 = vpop.permute.xlu0 %839
    %849 = vrot.lane.b32.xlu0 %v660, 16
    %v850 = vpop.permute.xlu0 %849
    %851 = vrot.lane.b32.xlu0 %v663, 16
    %v852 = vpop.permute.xlu0 %851
    %853 = vrot.lane.b32.xlu0 %v666, 16
    %v854 = vpop.permute.xlu0 %853
    %855 = vrot.lane.b32.xlu0 %v669, 16
    %v856 = vpop.permute.xlu0 %855
    %865 = vrot.lane.b32.xlu0 %v818, 24
    %v866 = vpop.permute.xlu0 %865
    %867 = vrot.lane.b32.xlu0 %v821, 24
    %v868 = vpop.permute.xlu0 %867
    %869 = vrot.lane.b32.xlu0 %v824, 24
    %v870 = vpop.permute.xlu0 %869
    %871 = vrot.lane.b32.xlu0 %v827, 24
    %v872 = vpop.permute.xlu0 %871
    %v877 = vsel %vm220, %v340, %v834
    %v878 = vsel %vm220, %v343, %v836
    %v879 = vsel %vm220, %v346, %v838
    %v880 = vsel %vm220, %v349, %v840
    %vm881 = vcmask 130048
    %v882 = vsel %vm881, %v877, %v850
    %v883 = vsel %vm881, %v878, %v852
    %v884 = vsel %vm881, %v879, %v854
    %v885 = vsel %vm881, %v880, %v856
    %vm886 = vcmask 195584
    %v887 = vsel %vm886, %v882, %v866
    %v888 = vsel %vm886, %v883, %v868
    %v889 = vsel %vm886, %v884, %v870
    %v890 = vsel %vm886, %v885, %v872
    %v891 = vperm.slane %v121, 2
    %v893 = vsel %vm124, %v887, 0
    %v896 = vsel %vm124, %v888, 0
    %v899 = vsel %vm124, %v889, 0
    %v902 = vsel %vm124, %v890, 0
    %904 = vmatpush.msra.mxu0 0.0
    %905 = vmatpush.msra.mxu0 0.0
    %906 = vmatpush.msra.mxu0 0.0
    %907 = vmatpush.msra.mxu0 0.0
    %908 = vmatpush.msra.mxu0 0.0
    %909 = vmatpush.msra.mxu0 0.0
    %910 = vmatpush.msra.mxu0 0.0
    %911 = vmatpush.msra.mxu0 0.0
    %912 = vmatpush.msra.mxu0 0.0
    %913 = vmatpush.msra.mxu0 0.0
    %914 = vmatpush.msra.mxu0 0.0
    %915 = vmatpush.msra.mxu0 0.0
    %916 = vmatpush.msra.mxu0 %v108
    %917 = vmatpush.msra.mxu0 %v107
    %918 = vmatpush.msra.mxu0 %v106
    %919 = vmatpush.msra.mxu0 %v105
    %920 = vmatmul.f32.gmra.mxu0 %v893
    %v921 = vpop.f32.mrf.mxu0
    %v922 = vadd.f32 %v891, %v921
    %923 = vmatmul.f32.gmra.mxu0 %v896
    %v924 = vpop.f32.mrf.mxu0
    %v925 = vadd.f32 %v891, %v924
    %926 = vmatmul.f32.gmra.mxu0 %v899
    %v927 = vpop.f32.mrf.mxu0
    %v928 = vadd.f32 %v891, %v927
    %929 = vmatmul.f32.gmra.mxu0 %v902
    %v930 = vpop.f32.mrf.mxu0
    %v931 = vadd.f32 %v891, %v930
    %932 = vdwg.mxu0
    %v933 = vadd.f32 %v81, %v922
    %v934 = vadd.f32 %v82, %v925
    %v935 = vadd.f32 %v83, %v928
    %v936 = vadd.f32 %v84, %v931
    %v937 = vsel %vm124, %v933, 0.0
    %938 = vadd.xlane.f32.xlu0 %v937
    %v939 = vpop.xlane.xlu0 %938
    %v940 = vsel %vm124, %v934, 0.0
    %941 = vadd.xlane.f32.xlu0 %v940
    %v942 = vpop.xlane.xlu0 %941
    %v943 = vsel %vm124, %v935, 0.0
    %944 = vadd.xlane.f32.xlu0 %v943
    %v945 = vpop.xlane.xlu0 %944
    %v946 = vsel %vm124, %v936, 0.0
    %947 = vadd.xlane.f32.xlu0 %v946
    %v948 = vpop.xlane.xlu0 %947
    %v949 = vrcp.pop 32.0
    %v950 = vmul.f32 32.0, %v949
    %v951 = vsub.f32 1.0, %v950
    %v952 = vmul.f32 %v949, %v951
    %v953 = vadd.f32 %v949, %v952
    %vm954 = vweird.f32 %v949
    %v955 = vsel %vm954, %v949, %v953
    %v956 = vmul.f32 %v939, %v955
    %v957 = vmul.f32 %v942, %v955
    %v958 = vmul.f32 %v945, %v955
    %v959 = vmul.f32 %v948, %v955
    %v960 = vsub.f32 %v933, %v956
    %v961 = vsub.f32 %v934, %v957
    %v962 = vsub.f32 %v935, %v958
    %v963 = vsub.f32 %v936, %v959
    %v964 = vmul.f32 %v960, %v960
    %v965 = vmul.f32 %v961, %v961
    %v966 = vmul.f32 %v962, %v962
    %v967 = vmul.f32 %v963, %v963
    %v968 = vsel %vm124, %v964, 0.0
    %969 = vadd.xlane.f32.xlu0 %v968
    %v970 = vpop.xlane.xlu0 %969
    %v971 = vsel %vm124, %v965, 0.0
    %972 = vadd.xlane.f32.xlu0 %v971
    %v973 = vpop.xlane.xlu0 %972
    %v974 = vsel %vm124, %v966, 0.0
    %975 = vadd.xlane.f32.xlu0 %v974
    %v976 = vpop.xlane.xlu0 %975
    %v977 = vsel %vm124, %v967, 0.0
    %978 = vadd.xlane.f32.xlu0 %v977
    %v979 = vpop.xlane.xlu0 %978
    %v980 = vmul.f32 %v970, %v955
    %v981 = vmul.f32 %v973, %v955
    %v982 = vmul.f32 %v976, %v955
    %v983 = vmul.f32 %v979, %v955
    %v984 = vadd.f32 %v980, 1e-05
    %v985 = vadd.f32 %v981, 1e-05
    %v986 = vadd.f32 %v982, 1e-05
    %v987 = vadd.f32 %v983, 1e-05
    %v988 = vrsqrt.pop %v984
    %v989 = vmul.f32 %v988, %v984
    %v990 = vmul.f32 %v989, %v988
    %v991 = vmul.f32 0.5, %v990
    %v992 = vsub.f32 1.5, %v991
    %v993 = vmul.f32 %v988, %v992
    %vm994 = vweird.f32 %v984
    %vm995 = vweird.f32 %v988
    %vm996 = vmor %vm994, %vm995
    %v997 = vsel %vm996, %v988, %v993
    %v998 = vrsqrt.pop %v985
    %v999 = vmul.f32 %v998, %v985
    %v1000 = vmul.f32 %v999, %v998
    %v1001 = vmul.f32 0.5, %v1000
    %v1002 = vsub.f32 1.5, %v1001
    %v1003 = vmul.f32 %v998, %v1002
    %vm1004 = vweird.f32 %v985
    %vm1005 = vweird.f32 %v998
    %vm1006 = vmor %vm1004, %vm1005
    %v1007 = vsel %vm1006, %v998, %v1003
    %v1008 = vrsqrt.pop %v986
    %v1009 = vmul.f32 %v1008, %v986
    %v1010 = vmul.f32 %v1009, %v1008
    %v1011 = vmul.f32 0.5, %v1010
    %v1012 = vsub.f32 1.5, %v1011
    %v1013 = vmul.f32 %v1008, %v1012
    %vm1014 = vweird.f32 %v986
    %vm1015 = vweird.f32 %v1008
    %vm1016 = vmor %vm1014, %vm1015
    %v1017 = vsel %vm1016, %v1008, %v1013
    %v1018 = vrsqrt.pop %v987
    %v1019 = vmul.f32 %v1018, %v987
    %v1020 = vmul.f32 %v1019, %v1018
    %v1021 = vmul.f32 0.5, %v1020
    %v1022 = vsub.f32 1.5, %v1021
    %v1023 = vmul.f32 %v1018, %v1022
    %vm1024 = vweird.f32 %v987
    %vm1025 = vweird.f32 %v1018
    %vm1026 = vmor %vm1024, %vm1025
    %v1027 = vsel %vm1026, %v1018, %v1023
    %v1028 = vmul.f32 %v960, %v997
    %v1029 = vmul.f32 %v961, %v1007
    %v1030 = vmul.f32 %v962, %v1017
    %v1031 = vmul.f32 %v963, %v1027
    %v1032 = vperm.slane %v121, 5
    %v1033 = vmul.f32 %v1028, %v1032
    %v1034 = vmul.f32 %v1029, %v1032
    %v1035 = vmul.f32 %v1030, %v1032
    %v1036 = vmul.f32 %v1031, %v1032
    %v1037 = vperm.slane %v121, 6
    %v1038 = vadd.f32 %v1033, %v1037
    %v1039 = vadd.f32 %v1034, %v1037
    %v1040 = vadd.f32 %v1035, %v1037
    %v1041 = vadd.f32 %v1036, %v1037
    %v1042 = vperm.slane %v121, 3
    %v1044 = vsel %vm124, %v1038, 0
    %v1047 = vsel %vm124, %v1039, 0
    %v1050 = vsel %vm124, %v1040, 0
    %v1053 = vsel %vm124, %v1041, 0
    %1055 = vmatpush.msra.mxu0 0.0
    %1056 = vmatpush.msra.mxu0 0.0
    %1057 = vmatpush.msra.mxu0 0.0
    %1058 = vmatpush.msra.mxu0 0.0
    %1059 = vmatpush.msra.mxu0 0.0
    %1060 = vmatpush.msra.mxu0 0.0
    %1061 = vmatpush.msra.mxu0 0.0
    %1062 = vmatpush.msra.mxu0 0.0
    %1063 = vmatpush.msra.mxu0 0.0
    %1064 = vmatpush.msra.mxu0 0.0
    %1065 = vmatpush.msra.mxu0 0.0
    %1066 = vmatpush.msra.mxu0 0.0
    %1067 = vmatpush.msra.mxu0 %v112
    %1068 = vmatpush.msra.mxu0 %v111
    %1069 = vmatpush.msra.mxu0 %v110
    %1070 = vmatpush.msra.mxu0 %v109
    %1071 = vmatmul.f32.gmra.mxu0 %v1044
    %v1072 = vpop.f32.mrf.mxu0
    %v1073 = vadd.f32 %v1042, %v1072
    %1074 = vmatmul.f32.gmra.mxu0 %v1047
    %v1075 = vpop.f32.mrf.mxu0
    %v1076 = vadd.f32 %v1042, %v1075
    %1077 = vmatmul.f32.gmra.mxu0 %v1050
    %v1078 = vpop.f32.mrf.mxu0
    %v1079 = vadd.f32 %v1042, %v1078
    %1080 = vmatmul.f32.gmra.mxu0 %v1053
    %v1081 = vpop.f32.mrf.mxu0
    %v1082 = vadd.f32 %v1042, %v1081
    %1083 = vdwg.mxu0
    %v1084 = vmax.f32 %v1073, 0.0
    %v1085 = vmax.f32 %v1076, 0.0
    %v1086 = vmax.f32 %v1079, 0.0
    %v1087 = vmax.f32 %v1082, 0.0
    %v1088 = vperm.slane %v121, 4
    %vm1089 = vcmask 523264
    %v1091 = vsel %vm1089, %v1084, 0
    %v1094 = vsel %vm1089, %v1085, 0
    %v1097 = vsel %vm1089, %v1086, 0
    %v1100 = vsel %vm1089, %v1087, 0
    %1102 = vmatpush.msra.mxu0 0.0
    %1103 = vmatpush.msra.mxu0 0.0
    %1104 = vmatpush.msra.mxu0 0.0
    %1105 = vmatpush.msra.mxu0 0.0
    %1106 = vmatpush.msra.mxu0 0.0
    %1107 = vmatpush.msra.mxu0 0.0
    %1108 = vmatpush.msra.mxu0 0.0
    %1109 = vmatpush.msra.mxu0 0.0
    %1110 = vmatpush.msra.mxu0 %v120
    %1111 = vmatpush.msra.mxu0 %v119
    %1112 = vmatpush.msra.mxu0 %v118
    %1113 = vmatpush.msra.mxu0 %v117
    %1114 = vmatpush.msra.mxu0 %v116
    %1115 = vmatpush.msra.mxu0 %v115
    %1116 = vmatpush.msra.mxu0 %v114
    %1117 = vmatpush.msra.mxu0 %v113
    %1118 = vmatmul.f32.gmra.mxu0 %v1091
    %v1119 = vpop.f32.mrf.mxu0
    %v1120 = vadd.f32 %v1088, %v1119
    %1121 = vmatmul.f32.gmra.mxu0 %v1094
    %v1122 = vpop.f32.mrf.mxu0
    %v1123 = vadd.f32 %v1088, %v1122
    %1124 = vmatmul.f32.gmra.mxu0 %v1097
    %v1125 = vpop.f32.mrf.mxu0
    %v1126 = vadd.f32 %v1088, %v1125
    %1127 = vmatmul.f32.gmra.mxu0 %v1100
    %v1128 = vpop.f32.mrf.mxu0
    %v1129 = vadd.f32 %v1088, %v1128
    %1130 = vdwg.mxu0
    %v1131 = vadd.f32 %v1038, %v1120
    %v1132 = vadd.f32 %v1039, %v1123
    %v1133 = vadd.f32 %v1040, %v1126
    %v1134 = vadd.f32 %v1041, %v1129
    %v1135 = vsel %vm124, %v1131, 0.0
    %1136 = vadd.xlane.f32.xlu0 %v1135
    %v1137 = vpop.xlane.xlu0 %1136
    %v1138 = vsel %vm124, %v1132, 0.0
    %1139 = vadd.xlane.f32.xlu0 %v1138
    %v1140 = vpop.xlane.xlu0 %1139
    %v1141 = vsel %vm124, %v1133, 0.0
    %1142 = vadd.xlane.f32.xlu0 %v1141
    %v1143 = vpop.xlane.xlu0 %1142
    %v1144 = vsel %vm124, %v1134, 0.0
    %1145 = vadd.xlane.f32.xlu0 %v1144
    %v1146 = vpop.xlane.xlu0 %1145
    %v1147 = vmul.f32 %v1137, %v955
    %v1148 = vmul.f32 %v1140, %v955
    %v1149 = vmul.f32 %v1143, %v955
    %v1150 = vmul.f32 %v1146, %v955
    %v1151 = vsub.f32 %v1131, %v1147
    %v1152 = vsub.f32 %v1132, %v1148
    %v1153 = vsub.f32 %v1133, %v1149
    %v1154 = vsub.f32 %v1134, %v1150
    %v1155 = vmul.f32 %v1151, %v1151
    %v1156 = vmul.f32 %v1152, %v1152
    %v1157 = vmul.f32 %v1153, %v1153
    %v1158 = vmul.f32 %v1154, %v1154
    %v1159 = vsel %vm124, %v1155, 0.0
    %1160 = vadd.xlane.f32.xlu0 %v1159
    %v1161 = vpop.xlane.xlu0 %1160
    %v1162 = vsel %vm124, %v1156, 0.0
    %1163 = vadd.xlane.f32.xlu0 %v1162
    %v1164 = vpop.xlane.xlu0 %1163
    %v1165 = vsel %vm124, %v1157, 0.0
    %1166 = vadd.xlane.f32.xlu0 %v1165
    %v1167 = vpop.xlane.xlu0 %1166
    %v1168 = vsel %vm124, %v1158, 0.0
    %1169 = vadd.xlane.f32.xlu0 %v1168
    %v1170 = vpop.xlane.xlu0 %1169
    %v1171 = vmul.f32 %v1161, %v955
    %v1172 = vmul.f32 %v1164, %v955
    %v1173 = vmul.f32 %v1167, %v955
    %v1174 = vmul.f32 %v1170, %v955
    %v1175 = vadd.f32 %v1171, 1e-05
    %v1176 = vadd.f32 %v1172, 1e-05
    %v1177 = vadd.f32 %v1173, 1e-05
    %v1178 = vadd.f32 %v1174, 1e-05
    %v1179 = vrsqrt.pop %v1175
    %v1180 = vmul.f32 %v1179, %v1175
    %v1181 = vmul.f32 %v1180, %v1179
    %v1182 = vmul.f32 0.5, %v1181
    %v1183 = vsub.f32 1.5, %v1182
    %v1184 = vmul.f32 %v1179, %v1183
    %vm1185 = vweird.f32 %v1175
    %vm1186 = vweird.f32 %v1179
    %vm1187 = vmor %vm1185, %vm1186
    %v1188 = vsel %vm1187, %v1179, %v1184
    %v1189 = vrsqrt.pop %v1176
    %v1190 = vmul.f32 %v1189, %v1176
    %v1191 = vmul.f32 %v1190, %v1189
    %v1192 = vmul.f32 0.5, %v1191
    %v1193 = vsub.f32 1.5, %v1192
    %v1194 = vmul.f32 %v1189, %v1193
    %vm1195 = vweird.f32 %v1176
    %vm1196 = vweird.f32 %v1189
    %vm1197 = vmor %vm1195, %vm1196
    %v1198 = vsel %vm1197, %v1189, %v1194
    %v1199 = vrsqrt.pop %v1177
    %v1200 = vmul.f32 %v1199, %v1177
    %v1201 = vmul.f32 %v1200, %v1199
    %v1202 = vmul.f32 0.5, %v1201
    %v1203 = vsub.f32 1.5, %v1202
    %v1204 = vmul.f32 %v1199, %v1203
    %vm1205 = vweird.f32 %v1177
    %vm1206 = vweird.f32 %v1199
    %vm1207 = vmor %vm1205, %vm1206
    %v1208 = vsel %vm1207, %v1199, %v1204
    %v1209 = vrsqrt.pop %v1178
    %v1210 = vmul.f32 %v1209, %v1178
    %v1211 = vmul.f32 %v1210, %v1209
    %v1212 = vmul.f32 0.5, %v1211
    %v1213 = vsub.f32 1.5, %v1212
    %v1214 = vmul.f32 %v1209, %v1213
    %vm1215 = vweird.f32 %v1178
    %vm1216 = vweird.f32 %v1209
    %vm1217 = vmor %vm1215, %vm1216
    %v1218 = vsel %vm1217, %v1209, %v1214
    %v1219 = vmul.f32 %v1151, %v1188
    %v1220 = vmul.f32 %v1152, %v1198
    %v1221 = vmul.f32 %v1153, %v1208
    %v1222 = vmul.f32 %v1154, %v1218
    %v1223 = vperm.slane %v121, 7
    %v1224 = vmul.f32 %v1219, %v1223
    %v1225 = vmul.f32 %v1220, %v1223
    %v1226 = vmul.f32 %v1221, %v1223
    %v1227 = vmul.f32 %v1222, %v1223
    %v1228 = vperm.slane %v122, 0
    %v1229 = vadd.f32 %v1224, %v1228
    %v1230 = vadd.f32 %v1225, %v1228
    %v1231 = vadd.f32 %v1226, %v1228
    %v1232 = vadd.f32 %v1227, %v1228
    %1233 = vst.msk [vmem:[#allocation10] sm:$0xff] %vm124, %v1229
    %1234 = vst.msk [vmem:[#allocation10 + $0x8] sm:$0xff] %vm124, %v1230
    %1235 = vst.msk [vmem:[#allocation10 + $0x10] sm:$0xff] %vm124, %v1231
    %1236 = vst.msk [vmem:[#allocation10 + $0x18] sm:$0xff] %vm124, %v1232
    // Predicated region
    $region34: #{tpu_custom_call.1} parent=1 // pred_check
      _
    $region35: #{tpu_custom_call.1} parent=1 // pred_check_branch
      %1238 = sbr.rel (0) target = $region37
    $region36: #{tpu_custom_call.1} parent=1 // pred_region
      %1240 = vsyncadd [#allocation4], 0
      %s1241 = sshll.u32 [#allocation10], 4
      %s1242 = int_to_ptr.vmem [resolvable:$true] %s1241
      %s1243 = sshll.u32 %s4, 4
      %s1244 = int_to_ptr.hbm [resolvable:$true] %s1243
      %1249 = dma.vmem_to_hbm [thread:$0]  %s1242, 512, %s1244, [#allocation4], 128, 128, 8
    $region37: #{tpu_custom_call.1} parent=1 // pred_fallthru
      _
    // Predicated region
    $region38: #{tpu_custom_call.1} parent=1 // pred_check
      _
    $region39: #{tpu_custom_call.1} parent=1 // pred_check_branch
      %1251 = sbr.rel (0) target = $region41
    $region40: #{tpu_custom_call.1} parent=1 // pred_region
      %1253 = dma.done [#allocation4], 512
    $region41: #{tpu_custom_call.1} parent=1 // pred_fallthru
      _
    %1254 = vsyncpa [#allocation3], 1
    %1255 = vsyncpa [#allocation6], 1
    %1256 = vsyncpa [#allocation9], 1
    %1257 = vsyncpa [#allocation4], 1

</llo_original>
